<compile_context>
chip_gen: v5e
topology: v5e:2x2
jax: 0.10.0
libtpu: 0.0.40
codegen_flags: <defaults>
</compile_context>

<pallas_src>
import math

import jax
import jax.numpy as jnp
from jax.experimental import pallas as pl
from jax.experimental.pallas import tpu as pltpu


def _wsum_kernel(scales_ref, inv2s_ref, x_ref, y_ref, o_ref):
    # scales_ref: VMEM (2*nF, 1) f32 = [w*scale1 ; (1-w)*scale2]
    # inv2s_ref:  VMEM (2*nF, 1) f32 = [1/(2*sigma1^2) ; 1/(2*sigma2^2)]
    # x_ref, y_ref: VMEM (D, tn)  -- points along the lane axis
    # o_ref:        VMEM (nF, tn) -- lane-dense output slab
    D = x_ref.shape[0]
    nF = o_ref.shape[0]

    # -||y - x||^2 as a sum over per-coordinate sublane rows: pure VPU work,
    # no cross-lane (XLU) reduce.
    neg_r2 = None
    for d in range(D):
        dd = y_ref[d:d + 1, :] - x_ref[d:d + 1, :]              # (1, tn)
        term = dd * dd
        neg_r2 = -term if neg_r2 is None else neg_r2 - term     # (1, tn)

    # Batch K1 and K2 across all nF components: one (2*nF, tn) slab, so the
    # exp is a single full-sublane EUP pass (2*nF == 8 here) instead of
    # 2*nF separate (1, tn) transcendentals.
    args = neg_r2 * inv2s_ref[...]               # (1,tn)*(2nF,1) -> (2nF, tn)
    e = jnp.exp(args) * scales_ref[...]          # (2nF, tn), scales lane-bcast

    # Fold the K1 half and the K2 half; single full-width unmasked store.
    o_ref[...] = (e[:nF, :] + e[nF:, :]).astype(o_ref.dtype)


def weighted_sum_kernel(x, y, params, F_shape, w, *, tn=None):
    """WeightedSumKernel.forward.

    x, y: (N, D) evaluation points.
    params: (4, nF) raw rows = [scale1, 1/(2*sigma1^2), scale2, 1/(2*sigma2^2)].
    Returns an array of shape (N,) + F_shape (== x.shape[:-1] + F_shape).
    """
    N, D = x.shape
    assert params.shape[0] == 4
    nF = params.shape[1]
    assert nF == math.prod(F_shape)

    # Fold the mixing weight into the scales on the host; stack both
    # sub-kernels along the sublane axis as (2*nF, 1) column vectors.
    w = float(w)
    scales = jnp.concatenate(
        [w * params[0], (1.0 - w) * params[2]], axis=0
    ).astype(jnp.float32).reshape(2 * nF, 1)
    inv2s = jnp.concatenate(
        [params[1], params[3]], axis=0
    ).astype(jnp.float32).reshape(2 * nF, 1)

    # Lane-dense layout: points along the lane axis (wrapper-side plumbing).
    xT = jnp.asarray(x, jnp.float32).T   # (D, N)
    yT = jnp.asarray(y, jnp.float32).T   # (D, N)

    # Collapse the grid: one step at small N, large lane tiles otherwise.
    if tn is None:
        tn = N if N <= 2048 else 2048
    assert N % tn == 0 and (tn == N or tn % 128 == 0)

    out = pl.pallas_call(
        _wsum_kernel,
        out_shape=jax.ShapeDtypeStruct((nF, N), jnp.float32),
        grid_spec=pltpu.PrefetchScalarGridSpec(
            num_scalar_prefetch=0,
            grid=(N // tn,),
            in_specs=[
                pl.BlockSpec((2 * nF, 1), lambda i: (0, 0)),     # folded scales
                pl.BlockSpec((2 * nF, 1), lambda i: (0, 0)),     # 1/(2 sigma^2)
                pl.BlockSpec((D, tn), lambda i: (0, i)),          # x lane-tile
                pl.BlockSpec((D, tn), lambda i: (0, i)),          # y lane-tile
            ],
            out_specs=pl.BlockSpec((nF, tn), lambda i: (0, i)),
        ),
        compiler_params=pltpu.CompilerParams(
            dimension_semantics=("parallel",)),
    )(scales, inv2s, xT, yT)

    # (nF, N) -> (N, F1, F2)
    return out.T.reshape((N,) + tuple(F_shape))


def reference(x, y, params, F_shape, w):
    """Pure-JAX reference of WeightedSumKernel.forward with Gaussian K1/K2."""
    diff = y - x
    r2 = jnp.sum(diff * diff, axis=-1, keepdims=True)
    scale1, inv2s1, scale2, inv2s2 = params
    k1 = scale1[None, :] * jnp.exp(-r2 * inv2s1[None, :])
    k2 = scale2[None, :] * jnp.exp(-r2 * inv2s2[None, :])
    out = w * k1 + (1.0 - w) * k2
    return out.reshape(x.shape[:-1] + tuple(F_shape))


if __name__ == "__main__":
    # Module-implied shapes: D = 2 manifold dims, F_shape = (2, 2) matrix-valued
    # kernel, N = 256 evaluation points, mixing weight w.
    # TODO(synk): Kernel.discretize / gridtools machinery is host-side indexing
    # logic and is not translated; only the forward pass is implemented.
    N, D = 256, 2
    F_shape = (2, 2)
    w = 0.3

    key = jax.random.PRNGKey(0)
    kx, ky = jax.random.split(key)
    x = jax.random.normal(kx, (N, D), dtype=jnp.float32)
    y = 0.25 * jax.random.normal(ky, (N, D), dtype=jnp.float32)

    # Deterministic sub-kernel parameters (synthetic, no checkpoint).
    scale1 = jnp.array([1.0, 0.5, 0.5, 1.0], dtype=jnp.float32)
    sigma1 = jnp.array([0.8, 1.2, 1.2, 0.8], dtype=jnp.float32)
    scale2 = jnp.array([0.9, -0.4, -0.4, 0.9], dtype=jnp.float32)
    sigma2 = jnp.array([1.5, 2.0, 2.0, 1.5], dtype=jnp.float32)
    params = jnp.stack([
        scale1,
        1.0 / (2.0 * sigma1 ** 2),
        scale2,
        1.0 / (2.0 * sigma2 ** 2),
    ], axis=0)  # (4, nF)

    out = weighted_sum_kernel(x, y, params, F_shape, w)
    out = jax.block_until_ready(out)

    ref = reference(x, y, params, F_shape, w)
    assert out.shape == (N,) + F_shape
    assert jnp.allclose(out, ref, atol=1e-5, rtol=1e-5)

    print("KERNEL_OK")
</pallas_src>

<mosaic_0001>
module attributes {stable_mosaic.version = 11 : i64} {
  func.func @_wsum_kernel(%arg0: i32, %arg1: memref<8x1xf32, #tpu.memory_space<vmem>>, %arg2: memref<8x1xf32, #tpu.memory_space<vmem>>, %arg3: memref<2x256xf32, #tpu.memory_space<vmem>>, %arg4: memref<2x256xf32, #tpu.memory_space<vmem>>, %arg5: memref<4x256xf32, #tpu.memory_space<vmem>>) attributes {dimension_semantics = [#tpu.dimension_semantics<parallel>], iteration_bounds = array<i64: 1>, scalar_prefetch = 0 : i64, scratch_operands = 0 : i64, tpu.core_type = #tpu.core_type<tc>, window_params = [{pipeline_mode = #tpu.pipeline_mode<synchronous>, transform_indices = @transform_0, window_bounds = array<i64: 8, 1>}, {pipeline_mode = #tpu.pipeline_mode<synchronous>, transform_indices = @transform_1, window_bounds = array<i64: 8, 1>}, {transform_indices = @transform_2, window_bounds = array<i64: 2, 256>}, {transform_indices = @transform_3, window_bounds = array<i64: 2, 256>}, {transform_indices = @transform_4, window_bounds = array<i64: 4, 256>}]} {
    %c0 = arith.constant 0 : index
    %c0_0 = arith.constant 0 : index
    %0 = vector.load %arg4[%c0, %c0_0] : memref<2x256xf32, #tpu.memory_space<vmem>>, vector<1x256xf32>
    %c0_1 = arith.constant 0 : index
    %c0_2 = arith.constant 0 : index
    %1 = vector.load %arg3[%c0_1, %c0_2] : memref<2x256xf32, #tpu.memory_space<vmem>>, vector<1x256xf32>
    %2 = arith.subf %0, %1 : vector<1x256xf32>
    %3 = arith.mulf %2, %2 : vector<1x256xf32>
    %cst = arith.constant 0.000000e+00 : f32
    %4 = vector.broadcast %cst : f32 to vector<1x256xf32>
    %5 = arith.subf %4, %3 : vector<1x256xf32>
    %c1 = arith.constant 1 : index
    %c0_3 = arith.constant 0 : index
    %6 = vector.load %arg4[%c1, %c0_3] : memref<2x256xf32, #tpu.memory_space<vmem>>, vector<1x256xf32>
    %c1_4 = arith.constant 1 : index
    %c0_5 = arith.constant 0 : index
    %7 = vector.load %arg3[%c1_4, %c0_5] : memref<2x256xf32, #tpu.memory_space<vmem>>, vector<1x256xf32>
    %8 = arith.subf %6, %7 : vector<1x256xf32>
    %9 = arith.mulf %8, %8 : vector<1x256xf32>
    %10 = arith.subf %5, %9 : vector<1x256xf32>
    %c0_6 = arith.constant 0 : index
    %c0_7 = arith.constant 0 : index
    %11 = vector.load %arg2[%c0_6, %c0_7] : memref<8x1xf32, #tpu.memory_space<vmem>>, vector<8x1xf32>
    %12 = vector.broadcast %10 : vector<1x256xf32> to vector<8x256xf32>
    %13 = vector.broadcast %11 : vector<8x1xf32> to vector<8x256xf32>
    %14 = arith.mulf %12, %13 : vector<8x256xf32>
    %15 = math.exp %14 : vector<8x256xf32>
    %c0_8 = arith.constant 0 : index
    %c0_9 = arith.constant 0 : index
    %16 = vector.load %arg1[%c0_8, %c0_9] : memref<8x1xf32, #tpu.memory_space<vmem>>, vector<8x1xf32>
    %17 = vector.broadcast %16 : vector<8x1xf32> to vector<8x256xf32>
    %18 = arith.mulf %15, %17 : vector<8x256xf32>
    %19 = vector.extract_strided_slice %18 {offsets = [0, 0], sizes = [4, 256], strides = [1, 1]} : vector<8x256xf32> to vector<4x256xf32>
    %20 = vector.extract_strided_slice %18 {offsets = [4, 0], sizes = [4, 256], strides = [1, 1]} : vector<8x256xf32> to vector<4x256xf32>
    %21 = arith.addf %19, %20 : vector<4x256xf32>
    %c0_10 = arith.constant 0 : index
    %c0_11 = arith.constant 0 : index
    %22 = vector.load %arg5[%c0_10, %c0_11] : memref<4x256xf32, #tpu.memory_space<vmem>>, vector<4x256xf32>
    tpu.vector_store %arg5[%c0_10, %c0_11], %21 {strides = array<i32>} : memref<4x256xf32, #tpu.memory_space<vmem>>, vector<4x256xf32>,
    return
  }
  func.func @transform_0(%arg0: i32) -> (i32, i32) {
    %c0_i32 = arith.constant 0 : i32
    %c0_i32_0 = arith.constant 0 : i32
    %c0_i32_1 = arith.constant 0 : i32
    return %c0_i32, %c0_i32_0 : i32, i32
  }
  func.func @transform_1(%arg0: i32) -> (i32, i32) {
    %c0_i32 = arith.constant 0 : i32
    %c0_i32_0 = arith.constant 0 : i32
    %c0_i32_1 = arith.constant 0 : i32
    return %c0_i32, %c0_i32_0 : i32, i32
  }
  func.func @transform_2(%arg0: i32) -> (i32, i32) {
    %c0_i32 = arith.constant 0 : i32
    %c0_i32_0 = arith.constant 0 : i32
    return %c0_i32, %arg0 : i32, i32
  }
  func.func @transform_3(%arg0: i32) -> (i32, i32) {
    %c0_i32 = arith.constant 0 : i32
    %c0_i32_0 = arith.constant 0 : i32
    return %c0_i32, %arg0 : i32, i32
  }
  func.func @transform_4(%arg0: i32) -> (i32, i32) {
    %c0_i32 = arith.constant 0 : i32
    %c0_i32_0 = arith.constant 0 : i32
    return %c0_i32, %arg0 : i32, i32
  }
}

</mosaic_0001>

<llo_original>
// kernel: tpu_custom_call.1
$region0: #{tpu_custom_call.1}
  #allocation0 [shape = 'u32[]', space=smem, size = 0x4, offset = 0x4, fixed_abs, tag = 'smem constant byte address 0x4 - core index']
  #allocation1 [shape = 'u32[72,128]{1,0:T(1,128)}', space=vmem, size = 0x9000, scoped, tag = 'internal scratch']
  %s0 = inlined_call_operand.vmem [shape: f32[8,1], index: 0, kind: input, shape index: {}]
  %s1 = inlined_call_operand.vmem [shape: f32[8,1], index: 1, kind: input, shape index: {}]
  %s2 = inlined_call_operand.vmem [shape: f32[2,256], index: 2, kind: input, shape index: {}]
  %s3 = inlined_call_operand.vmem [shape: f32[2,256], index: 3, kind: input, shape index: {}]
  %s4 = inlined_call_operand.hbm [shape: f32[4,256], index: 4, kind: output, shape index: {}]
  %s5 = sld [smem:[#allocation0]]
  $region26: #{tpu_custom_call.1} parent=0
    _
  %s7 = ssub.s32 1, %s5
  %s8 = scalar_select 0, %s7, %s5
  $region1: #{tpu_custom_call.1} parent=0
    #allocation2 [shape = 'u8[4096]{0}', space=vmem, size = 0x1000, scoped, tag = 'output window, operand 0, single buffered']
    #allocation3 [shape = 's32[1]{0}', space=sflag, size = 0x4, scoped, tag = 'scoped memory for tpu_custom_call.1']
    %9 = vsyncpa [#allocation3], 0
    // Predicated region
    $region2: #{tpu_custom_call.1} parent=1 // pred_check
      _
    $region3: #{tpu_custom_call.1} parent=1 // pred_check_branch
      %11 = sbr.rel (0) target = $region5
    $region4: #{tpu_custom_call.1} parent=1 // pred_region
      _
    $region5: #{tpu_custom_call.1} parent=1 // pred_fallthru
      _
    // Predicated region
    $region6: #{tpu_custom_call.1} parent=1 // pred_check
      _
    $region7: #{tpu_custom_call.1} parent=1 // pred_check_branch
      %13 = sbr.rel (0) target = $region9
    $region8: #{tpu_custom_call.1} parent=1 // pred_region
      _
    $region9: #{tpu_custom_call.1} parent=1 // pred_fallthru
      _
    // Predicated region
    $region10: #{tpu_custom_call.1} parent=1 // pred_check
      _
    $region11: #{tpu_custom_call.1} parent=1 // pred_check_branch
      %15 = sbr.rel (0) target = $region13
    $region12: #{tpu_custom_call.1} parent=1 // pred_region
      _
    $region13: #{tpu_custom_call.1} parent=1 // pred_fallthru
      _
    // Predicated region
    $region14: #{tpu_custom_call.1} parent=1 // pred_check
      _
    $region15: #{tpu_custom_call.1} parent=1 // pred_check_branch
      %17 = sbr.rel (0) target = $region17
    $region16: #{tpu_custom_call.1} parent=1 // pred_region
      _
    $region17: #{tpu_custom_call.1} parent=1 // pred_fallthru
      _
    %v18 = vld [vmem:[%s3] ss:$2 sm:$0x3]
    %v19 = vld [vmem:[%s2] ss:$2 sm:$0x3]
    %v20 = vsub.f32 %v18, %v19
    %v21 = vmul.f32 %v20, %v20
    %v22 = vsub.f32 0.0, %v21
    %s23 = scalar_lea.vmem %s3, 1
    %v24 = vld [vmem:[%s23] ss:$2 sm:$0x3]
    %s25 = scalar_lea.vmem %s2, 1
    %v26 = vld [vmem:[%s25] ss:$2 sm:$0x3]
    %v27 = vsub.f32 %v24, %v26
    %v28 = vmul.f32 %v27, %v27
    %v29 = vsub.f32 %v22, %v28
    %v30 = vld [vmem:[%s1] sm:$0xff]
    %v32 = vperm.slane %v29, 0
    %v33 = vperm.slane %v29, 1
    %37 = vset.pattern.permute.xlu0 0
    %38 = vperm.xlu0 %37, %v30
    %v39 = vpop.permute.xlu0 %38
    %v41 = vmul.f32 %v32, %v39
    %v42 = vmul.f32 %v33, %v39
    %v43 = vmul.f32 %v41, 1.442695
    %v44 = vpow.pop %v43
    %v45 = vmul.f32 %v42, 1.442695
    %v46 = vpow.pop %v45
    %v47 = vld [vmem:[%s0] sm:$0xff]
    %49 = vset.pattern.permute.xlu0 0
    %50 = vperm.xlu0 %49, %v47
    %v51 = vpop.permute.xlu0 %50
    %v53 = vmul.f32 %v44, %v51
    %v54 = vmul.f32 %v46, %v51
    %v57 = vrot.slane %v53, 4
    %v58 = vrot.slane %v54, 4
    %v61 = vadd.f32 %v53, %v57
    %v62 = vadd.f32 %v54, %v58
    %v65 = vrot.slane %v62, 4
    %vm66 = vcmask 1043456
    %v67 = vsel %vm66, %v61, %v65
    %69 = vst [vmem:[#allocation2] sm:$0xff] %v67
    // Predicated region
    $region18: #{tpu_custom_call.1} parent=1 // pred_check
      _
    $region19: #{tpu_custom_call.1} parent=1 // pred_check_branch
      %71 = sbr.rel (0) target = $region21
    $region20: #{tpu_custom_call.1} parent=1 // pred_region
      %73 = vsyncadd [#allocation3], 0
      %s75 = sshll.u32 [#allocation2], 4
      %s76 = int_to_ptr.vmem [resolvable:$true] %s75
      %s77 = sshll.u32 %s4, 4
      %s78 = int_to_ptr.hbm [resolvable:$true] %s77
      %80 = dma.vmem_to_hbm [thread:$0]  %s76, 128, %s78, [#allocation3]
    $region21: #{tpu_custom_call.1} parent=1 // pred_fallthru
      _
    // Predicated region
    $region22: #{tpu_custom_call.1} parent=1 // pred_check
      _
    $region23: #{tpu_custom_call.1} parent=1 // pred_check_branch
      %82 = sbr.rel (0) target = $region25
    $region24: #{tpu_custom_call.1} parent=1 // pred_region
      %84 = dma.done [#allocation3], 128
    $region25: #{tpu_custom_call.1} parent=1 // pred_fallthru
      _
    %85 = vsyncpa [#allocation3], 1

</llo_original>
